<compile_context>
chip_gen: v5e
topology: v5e:2x2
jax: 0.10.0
libtpu: 0.0.40
codegen_flags: <defaults>
</compile_context>

<pallas_src>
import jax
import jax.numpy as jnp
from jax.experimental import pallas as pl
from jax.experimental.pallas import tpu as pltpu


# ---------------------------------------------------------------------------
# Kernel: one grid step = one (batch-tile, seq-tile) block.
#   m_ref : (TB, 1,  H) scaled dropout mask in x.dtype (constant over seq tiles)
#   x_ref : (TB, ts, H) input tile
#   o_ref : (TB, ts, H) output tile
# Pure HBM streaming; the only compute is one broadcast vmul per vreg.
# ---------------------------------------------------------------------------
def rnn_dropout_kernel(m_ref, x_ref, o_ref):
    o_ref[...] = x_ref[...] * m_ref[...]


# ---------------------------------------------------------------------------
# Tiling / VMEM sizing helpers
# ---------------------------------------------------------------------------
_BLOCK_BUDGET_BYTES = 4 << 20  # ~4 MiB per (TB, ts, H) slab: flat part of HBM roofline


def _vmem_ceiling_bytes() -> int:
    """Safe scoped-VMEM ceiling for this chip (conservative if query fails)."""
    try:
        cap = int(getattr(pltpu.get_tpu_info(), "vmem_capacity_bytes"))
        if cap <= 0:
            raise ValueError
    except Exception:
        cap = 64 << 20  # v7x per-TensorCore physical VMEM (the smallest of the fleet)
    return (cap * 3) // 4  # ~25% headroom for compiler-internal scratch


def _largest_divisor_leq(n: int, cap: int) -> int:
    cap = max(1, min(n, cap))
    for d in range(cap, 0, -1):
        if n % d == 0:
            return d
    return 1


def _pick_seq_tile(S: int, sub: int, max_rows: int) -> int:
    """Largest seq tile <= max_rows, multiple of `sub`, preferring a divisor of S."""
    if S <= max_rows:
        return S
    best = max(sub, (max_rows // sub) * sub)
    for cand in range(best, max(sub, best // 2) - 1, -sub):
        if S % cand == 0:
            return cand  # no ragged last tile
    return best


def _pick_tiles(B: int, S: int, H: int, itemsize: int, block_budget: int):
    """Pick (TB, ts) so the (TB, ts, H) slab is ~block_budget bytes."""
    # Packed-sublane multiple for the dtype: f32 -> 8, bf16 -> 16, int8/fp8 -> 32.
    sub = {1: 32, 2: 16}.get(itemsize, 8)
    row_bytes = max(1, H * itemsize)
    max_rows = max(sub, (block_budget // row_bytes) // sub * sub)

    ts = _pick_seq_tile(S, sub, max_rows)
    if ts == S:
        # Whole seq fits: merge batch elements into the block up to the budget.
        tb = _largest_divisor_leq(B, max(1, max_rows // max(1, S)))
    else:
        tb = 1

    # Keep >= 2 grid steps along a "parallel" axis so v7x's 2 TensorCores both work.
    if pl.cdiv(B, tb) * pl.cdiv(S, ts) == 1:
        if B >= 2:
            tb = _largest_divisor_leq(B, (B + 1) // 2)
        elif S >= 2 * sub:
            ts = max(sub, ((pl.cdiv(S, 2) + sub - 1) // sub) * sub)
    return tb, ts


def _dropout_mask(seed: int, B: int, H: int, p: float, dtype):
    """Scaled RNN-dropout mask, (B, 1, H) in `dtype` (matches torch's
    x.new(sz).bernoulli_(1-p).div_(1-p))."""
    keep = jax.random.bernoulli(jax.random.PRNGKey(seed), 1.0 - p, (B, 1, H))
    return (keep.astype(jnp.float32) * jnp.float32(1.0 / (1.0 - p))).astype(dtype)


# ---------------------------------------------------------------------------
# Public wrapper
# ---------------------------------------------------------------------------
def rnn_dropout(x, *, p: float = 0.5, seed: int = 0, training: bool = True,
                donate_x: bool = False):
    """Pallas implementation of RNNDropout.forward for x of shape (B, S, H)."""
    if not training or p == 0.0:
        return x
    if not (0.0 <= p < 1.0):
        raise ValueError(f"p must be in [0, 1), got {p}")

    B, S, H = x.shape
    itemsize = jnp.dtype(x.dtype).itemsize

    # Mask is tiny (B*H): build it (already scaled, in x.dtype) in the wrapper.
    mask = _dropout_mask(seed, B, H, p, x.dtype)

    tb, ts = _pick_tiles(B, S, H, itemsize, _BLOCK_BUDGET_BYTES)
    n_b, n_s = pl.cdiv(B, tb), pl.cdiv(S, ts)

    # Explicit VMEM limit covering double-buffered in/out blocks + mask blocks,
    # capped by a generation-aware ceiling (v7x: 64 MiB physical per TC).
    block_bytes = tb * ts * H * itemsize
    mask_bytes = tb * H * itemsize
    footprint = 2 * (2 * block_bytes) + 2 * mask_bytes
    vmem_limit = int(min(_vmem_ceiling_bytes(), max(16 << 20, 2 * footprint)))

    cost = pl.CostEstimate(
        flops=B * S * H,                                       # one multiply / element
        transcendentals=0,
        bytes_accessed=2 * B * S * H * itemsize + B * H * itemsize,
    )

    kwargs = {}
    if donate_x:
        # x (input index 1) shares its HBM buffer with the output. Only enable
        # when x is not needed after the call.
        kwargs["input_output_aliases"] = {1: 0}

    # TODO(synk): for H not a multiple of 128 (e.g. fastai's 400/1150), pad H to
    # the next multiple of 128 upstream of this call for fully lane-dense stores;
    # the kernel remains correct for arbitrary H since blocks span the full H dim.
    return pl.pallas_call(
        rnn_dropout_kernel,
        out_shape=jax.ShapeDtypeStruct((B, S, H), x.dtype),
        grid=(n_b, n_s),
        in_specs=[
            pl.BlockSpec((tb, 1, H), lambda b, s: (b, 0, 0)),    # scaled mask (per batch tile)
            pl.BlockSpec((tb, ts, H), lambda b, s: (b, s, 0)),   # x tile
        ],
        out_specs=pl.BlockSpec((tb, ts, H), lambda b, s: (b, s, 0)),
        compiler_params=pltpu.CompilerParams(
            dimension_semantics=("parallel", "parallel"),
            vmem_limit_bytes=vmem_limit,
        ),
        cost_estimate=cost,
        **kwargs,
    )(mask, x)


# ---------------------------------------------------------------------------
# Self-test
# ---------------------------------------------------------------------------
if __name__ == "__main__":
    B, S, H = 2, 8, 128
    p = 0.5
    seed = 1234

    x = jax.random.normal(jax.random.PRNGKey(0), (B, S, H), dtype=jnp.float32)

    out = jax.block_until_ready(rnn_dropout(x, p=p, seed=seed, training=True))

    # Reference: same deterministic mask, plain-JAX broadcast multiply.
    mask = _dropout_mask(seed, B, H, p, x.dtype)
    ref = x * mask
    assert bool(jnp.allclose(out, ref)), "pallas output != reference"

    # Mask values are exactly 0 or 1/(1-p); dropped (b, h) columns are zero for
    # every seq position (mask is constant along seq_len by construction).
    scale = 1.0 / (1.0 - p)
    assert bool(jnp.all(jnp.isclose(mask, 0.0) | jnp.isclose(mask, scale)))
    dropped = jnp.isclose(mask, 0.0)  # (B, 1, H), broadcasts over seq
    assert bool(jnp.all(jnp.where(dropped, out == 0.0, True)))

    # Eval mode / p==0 passthrough.
    assert bool(jnp.all(rnn_dropout(x, p=p, training=False) == x))
    assert bool(jnp.all(rnn_dropout(x, p=0.0, training=True) == x))

    # bf16 path (exercises dtype-aware sublane rounding + bf16 broadcast multiply).
    xb = x.astype(jnp.bfloat16)
    outb = jax.block_until_ready(rnn_dropout(xb, p=p, seed=seed, training=True))
    refb = xb * _dropout_mask(seed, B, H, p, jnp.bfloat16)
    assert bool(jnp.allclose(outb.astype(jnp.float32), refb.astype(jnp.float32),
                             rtol=1e-2, atol=1e-2))

    print("KERNEL_OK")
</pallas_src>

<mosaic_0001>
module attributes {stable_mosaic.version = 11 : i64} {
  func.func @rnn_dropout_kernel(%arg0: i32, %arg1: i32, %arg2: memref<1x1x128xf32, #tpu.memory_space<vmem>>, %arg3: memref<1x8x128xf32, #tpu.memory_space<vmem>>, %arg4: memref<1x8x128xf32, #tpu.memory_space<vmem>>) attributes {dimension_semantics = [#tpu.dimension_semantics<parallel>, #tpu.dimension_semantics<parallel>], iteration_bounds = array<i64: 2, 1>, scalar_prefetch = 0 : i64, scratch_operands = 0 : i64, tpu.core_type = #tpu.core_type<tc>, window_params = [{transform_indices = @transform_0, window_bounds = array<i64: 1, 1, 128>}, {transform_indices = @transform_1, window_bounds = array<i64: 1, 8, 128>}, {transform_indices = @transform_2, window_bounds = array<i64: 1, 8, 128>}]} {
    %c0 = arith.constant 0 : index
    %c0_0 = arith.constant 0 : index
    %c0_1 = arith.constant 0 : index
    %0 = vector.load %arg3[%c0, %c0_0, %c0_1] : memref<1x8x128xf32, #tpu.memory_space<vmem>>, vector<1x8x128xf32>
    %c0_2 = arith.constant 0 : index
    %c0_3 = arith.constant 0 : index
    %c0_4 = arith.constant 0 : index
    %1 = vector.load %arg2[%c0_2, %c0_3, %c0_4] : memref<1x1x128xf32, #tpu.memory_space<vmem>>, vector<1x1x128xf32>
    %2 = vector.broadcast %1 : vector<1x1x128xf32> to vector<1x8x128xf32>
    %3 = arith.mulf %0, %2 : vector<1x8x128xf32>
    %c0_5 = arith.constant 0 : index
    %c0_6 = arith.constant 0 : index
    %c0_7 = arith.constant 0 : index
    %4 = vector.load %arg4[%c0_5, %c0_6, %c0_7] : memref<1x8x128xf32, #tpu.memory_space<vmem>>, vector<1x8x128xf32>
    tpu.vector_store %arg4[%c0_5, %c0_6, %c0_7], %3 {strides = array<i32>} : memref<1x8x128xf32, #tpu.memory_space<vmem>>, vector<1x8x128xf32>,
    return
  }
  func.func @transform_0(%arg0: i32, %arg1: i32) -> (i32, i32, i32) {
    %c0_i32 = arith.constant 0 : i32
    %c0_i32_0 = arith.constant 0 : i32
    %c0_i32_1 = arith.constant 0 : i32
    return %arg0, %c0_i32, %c0_i32_0 : i32, i32, i32
  }
  func.func @transform_1(%arg0: i32, %arg1: i32) -> (i32, i32, i32) {
    %c0_i32 = arith.constant 0 : i32
    %c0_i32_0 = arith.constant 0 : i32
    return %arg0, %arg1, %c0_i32 : i32, i32, i32
  }
  func.func @transform_2(%arg0: i32, %arg1: i32) -> (i32, i32, i32) {
    %c0_i32 = arith.constant 0 : i32
    %c0_i32_0 = arith.constant 0 : i32
    return %arg0, %arg1, %c0_i32 : i32, i32, i32
  }
}

</mosaic_0001>

<llo_original>
// kernel: tpu_custom_call.1
$region0: #{tpu_custom_call.1}
  #allocation0 [shape = 'u32[]', space=smem, size = 0x4, offset = 0x4, fixed_abs, tag = 'smem constant byte address 0x4 - core index']
  #allocation1 [shape = 'u32[72,128]{1,0:T(1,128)}', space=vmem, size = 0x9000, scoped, tag = 'internal scratch']
  %s0 = inlined_call_operand.hbm [shape: f32[2,1,128], index: 0, kind: input, shape index: {}]
  %s1 = inlined_call_operand.hbm [shape: f32[2,8,128], index: 1, kind: input, shape index: {}]
  %s2 = inlined_call_operand.hbm [shape: f32[2,8,128], index: 2, kind: output, shape index: {}]
  %s3 = sld [smem:[#allocation0]]
  $region49: #{tpu_custom_call.1} parent=0
    _
  %s5 = ssub.s32 1, %s3
  %s6 = scalar_select 0, %s5, %s3
  $region1: #{tpu_custom_call.1} parent=0
    #allocation2 [shape = 'u8[1024]{0}', space=vmem, size = 0x400, scoped, tag = 'input window, operand 0']
    #allocation3 [shape = 's32[2]{0}', space=sflag, size = 0x8, scoped, tag = 'scoped memory for tpu_custom_call.1']
    #allocation4 [shape = 's32[2]{0}', space=sflag, size = 0x8, scoped, tag = 'scoped memory for tpu_custom_call.1']
    #allocation5 [shape = 'u8[8192]{0}', space=vmem, size = 0x2000, scoped, tag = 'input window, operand 1']
    #allocation6 [shape = 's32[2]{0}', space=sflag, size = 0x8, scoped, tag = 'scoped memory for tpu_custom_call.1']
    #allocation7 [shape = 'u8[8192]{0}', space=vmem, size = 0x2000, scoped, tag = 'output window, operand 0']
    %7 = vsyncpa [#allocation3], 0
    %s8 = scalar_lea.sflag [#allocation3], 1
    %9 = vsyncpa %s8, 0
    %10 = vsyncpa [#allocation6], 0
    %s11 = scalar_lea.sflag [#allocation6], 1
    %12 = vsyncpa %s11, 0
    %13 = vsyncpa [#allocation4], 0
    %s14 = scalar_lea.sflag [#allocation4], 1
    %15 = vsyncpa %s14, 0
    loop: start=0, step=1, limit=4
    $region2: #{tpu_custom_call.1} parent=1 // loop_pre_header
      _
    $region3: #{tpu_custom_call.1} parent=1 // loop_header
      %s17 = sphi 0, %s21
      %p18 = scmp.ge.s32.totalorder %s17, 4
      %s24 = sphi 0, %s36
      %s25 = sphi 0, %s32
      %s26 = sphi 0, %s24
      %s27 = sphi 0, %s25
      %s28 = sphi 0, %s26
      %s29 = sphi 0, %s27
      %s39 = sphi 0, %s41
      %s42 = sphi 0, %s39
      %s43 = sphi 0, %s42
      %s59 = sphi 0, %s43
      %s67 = sphi 0, %s69
      %s70 = sphi 0, %s67
      %s71 = sphi 0, %s70
      %s87 = sphi 0, %s71
      %s95 = sphi 0, %s97
      %s98 = sphi 0, %s95
      %s99 = sphi 0, %s98
      %s115 = sphi 0, %s99
    $region4: #{tpu_custom_call.1} parent=1 // loop_header_branch
      %20 = sbr.rel (%p18) target = $region8
    $region5: #{tpu_custom_call.1} parent=1 // loop_body
      %s22 = ssub.s32 %s17, 1
      %s23 = ssub.s32 %s17, 2
      %s30 = sadd.s32 1, %s25
      %p31 = scmp.ge.s32.totalorder %s30, 1
      %s32 = scalar_select %p31, 0, %s30
      %s33 = sadd.s32 1, %s24
      %s34 = scalar_select %p31, %s33, %s24
      %p35 = scmp.ge.s32.totalorder %s34, 2
      %s36 = scalar_select %p35, 0, %s34
      %s37 = ssub.s32 %s24, %s36
      %p38 = scmp.eq.s32.totalorder %s37, 0
      %s40 = sadd.s32 %s39, 1
      %s41 = scalar_select %p38, %s39, %s40
      %p44 = pneg %p38
      %p45 = scmp.eq.s32.totalorder %s17, 1
      %p46 = por %p44, %p45
      %p47 = scmp.ne.s32.totalorder %s39, %s42
      %p48 = scmp.eq.s32.totalorder %s17, 0
      %p49 = por %p47, %p48
      %p50 = scmp.ne.s32.totalorder %s39, %s42
      %p51 = scmp.eq.s32.totalorder %s22, 1
      %p52 = por %p50, %p51
      %p53 = scmp.ne.s32.totalorder %s42, %s43
      %p54 = scmp.eq.s32.totalorder %s22, 0
      %p55 = por %p53, %p54
      %p56 = scmp.ne.s32.totalorder %s42, %s43
      %p57 = scmp.eq.s32.totalorder %s23, 1
      %p58 = por %p56, %p57
      %p60 = scmp.ne.s32.totalorder %s43, %s59
      %p61 = scmp.eq.s32.totalorder %s23, 0
      %p62 = por %p60, %p61
      %s63 = ssub.s32 %s24, %s36
      %s64 = ssub.s32 %s25, %s32
      %s65 = sor.u32 %s63, %s64
      %p66 = scmp.eq.s32.totalorder %s65, 0
      %s68 = sadd.s32 %s67, 1
      %s69 = scalar_select %p66, %s67, %s68
      %p72 = pneg %p66
      %p73 = scmp.eq.s32.totalorder %s17, 1
      %p74 = por %p72, %p73
      %p75 = scmp.ne.s32.totalorder %s67, %s70
      %p76 = scmp.eq.s32.totalorder %s17, 0
      %p77 = por %p75, %p76
      %p78 = scmp.ne.s32.totalorder %s67, %s70
      %p79 = scmp.eq.s32.totalorder %s22, 1
      %p80 = por %p78, %p79
      %p81 = scmp.ne.s32.totalorder %s70, %s71
      %p82 = scmp.eq.s32.totalorder %s22, 0
      %p83 = por %p81, %p82
      %p84 = scmp.ne.s32.totalorder %s70, %s71
      %p85 = scmp.eq.s32.totalorder %s23, 1
      %p86 = por %p84, %p85
      %p88 = scmp.ne.s32.totalorder %s71, %s87
      %p89 = scmp.eq.s32.totalorder %s23, 0
      %p90 = por %p88, %p89
      %s91 = ssub.s32 %s24, %s36
      %s92 = ssub.s32 %s25, %s32
      %s93 = sor.u32 %s91, %s92
      %p94 = scmp.eq.s32.totalorder %s93, 0
      %s96 = sadd.s32 %s95, 1
      %s97 = scalar_select %p94, %s95, %s96
      %p100 = pneg %p94
      %p101 = scmp.eq.s32.totalorder %s17, 1
      %p102 = por %p100, %p101
      %p103 = scmp.ne.s32.totalorder %s95, %s98
      %p104 = scmp.eq.s32.totalorder %s17, 0
      %p105 = por %p103, %p104
      %p106 = scmp.ne.s32.totalorder %s95, %s98
      %p107 = scmp.eq.s32.totalorder %s22, 1
      %p108 = por %p106, %p107
      %p109 = scmp.ne.s32.totalorder %s98, %s99
      %p110 = scmp.eq.s32.totalorder %s22, 0
      %p111 = por %p109, %p110
      %p112 = scmp.ne.s32.totalorder %s98, %s99
      %p113 = scmp.eq.s32.totalorder %s23, 1
      %p114 = por %p112, %p113
      %p116 = scmp.ne.s32.totalorder %s99, %s115
      %p117 = scmp.eq.s32.totalorder %s23, 0
      %p118 = por %p116, %p117
      %p119 = scmp.le.s32.totalorder 1, %s17
      %p120 = scmp.lt.s32.totalorder %s17, 3
      %p121 = pnand %p119, %p120
      %p122 = pneg %p121
      // Predicated region
      $region9: #{tpu_custom_call.1} parent=5 // pred_check
        _
      $region10: #{tpu_custom_call.1} parent=5 // pred_check_branch
        %124 = sbr.rel (%p121) target = $region12
      $region11: #{tpu_custom_call.1} parent=5 // pred_region
        %s125 = ssub.s32 %s17, 1
      $region12: #{tpu_custom_call.1} parent=5 // pred_fallthru
        _
      %p126 = scmp.lt.s32.totalorder %s17, 2
      // Predicated region
      $region13: #{tpu_custom_call.1} parent=5 // pred_check
        %p127 = pneg %p126
      $region14: #{tpu_custom_call.1} parent=5 // pred_check_branch
        %129 = sbr.rel (%p127) target = $region16
      $region15: #{tpu_custom_call.1} parent=5 // pred_region
        // Predicated region
        $region17: #{tpu_custom_call.1} parent=15 // pred_check
          %p130 = pneg %p49
        $region18: #{tpu_custom_call.1} parent=15 // pred_check_branch
          %132 = sbr.rel (%p130) target = $region20
        $region19: #{tpu_custom_call.1} parent=15 // pred_region
          %s133 = sand.u32 %s39, 1
          %s134 = scalar_lea.sflag [#allocation3], %s133
          %s135 = sand.u32 %s39, 1
          %s136 = scalar_lea.vmem [#allocation2], %s135
          %138 = vsyncadd %s134, 0
          %s139 = scalar_lea.hbm %s0, %s24
          %s141 = sshll.u32 %s139, 4
          %s142 = int_to_ptr.hbm [resolvable:$true] %s141
          %s143 = sshll.u32 %s136, 4
          %s144 = int_to_ptr.vmem [resolvable:$true] %s143
          %146 = dma.hbm_to_vmem [thread:$0]  %s142, 16, %s144, %s134
        $region20: #{tpu_custom_call.1} parent=15 // pred_fallthru
          _
        // Predicated region
        $region21: #{tpu_custom_call.1} parent=15 // pred_check
          %p147 = pneg %p77
        $region22: #{tpu_custom_call.1} parent=15 // pred_check_branch
          %149 = sbr.rel (%p147) target = $region24
        $region23: #{tpu_custom_call.1} parent=15 // pred_region
          %s150 = sand.u32 %s67, 1
          %s151 = scalar_lea.sflag [#allocation6], %s150
          %s152 = sand.u32 %s67, 1
          %s153 = smul.addr %s152, 8
          %s154 = scalar_lea.vmem [#allocation5], %s153
          %156 = vsyncadd %s151, 0
          %s157 = sadd.s32 %s25, %s24
          %s158 = smul.addr %s157, 8
          %s159 = scalar_lea.hbm %s1, %s158
          %s161 = sshll.u32 %s159, 4
          %s162 = int_to_ptr.hbm [resolvable:$true] %s161
          %s163 = sshll.u32 %s154, 4
          %s164 = int_to_ptr.vmem [resolvable:$true] %s163
          %166 = dma.hbm_to_vmem [thread:$0]  %s162, 128, %s164, %s151
        $region24: #{tpu_custom_call.1} parent=15 // pred_fallthru
          _
      $region16: #{tpu_custom_call.1} parent=5 // pred_fallthru
        _
      %p167 = scmp.le.s32.totalorder 1, %s17
      %p168 = scmp.lt.s32.totalorder %s17, 3
      %p169 = pnand %p167, %p168
      %p170 = pneg %p169
      // Predicated region
      $region25: #{tpu_custom_call.1} parent=5 // pred_check
        _
      $region26: #{tpu_custom_call.1} parent=5 // pred_check_branch
        %172 = sbr.rel (%p169) target = $region28
      $region27: #{tpu_custom_call.1} parent=5 // pred_region
        %s173 = ssub.s32 %s17, 1
        %s174 = sand.u32 %s42, 1
        %s175 = scalar_lea.sflag [#allocation3], %s174
        %s176 = sand.u32 %s42, 1
        %s177 = scalar_lea.vmem [#allocation2], %s176
        // Predicated region
        $region29: #{tpu_custom_call.1} parent=27 // pred_check
          %p178 = pneg %p55
        $region30: #{tpu_custom_call.1} parent=27 // pred_check_branch
          %180 = sbr.rel (%p178) target = $region32
        $region31: #{tpu_custom_call.1} parent=27 // pred_region
          %182 = dma.done %s175, 16
        $region32: #{tpu_custom_call.1} parent=27 // pred_fallthru
          _
        %s183 = sand.u32 %s70, 1
        %s184 = scalar_lea.sflag [#allocation6], %s183
        %s185 = sand.u32 %s70, 1
        %s186 = smul.addr %s185, 8
        %s187 = scalar_lea.vmem [#allocation5], %s186
        // Predicated region
        $region33: #{tpu_custom_call.1} parent=27 // pred_check
          %p188 = pneg %p83
        $region34: #{tpu_custom_call.1} parent=27 // pred_check_branch
          %190 = sbr.rel (%p188) target = $region36
        $region35: #{tpu_custom_call.1} parent=27 // pred_region
          %192 = dma.done %s184, 128
        $region36: #{tpu_custom_call.1} parent=27 // pred_fallthru
          _
        %s193 = sand.u32 %s42, 1
        %s194 = scalar_lea.sflag [#allocation3], %s193
        %s195 = sand.u32 %s42, 1
        %s196 = scalar_lea.vmem [#allocation2], %s195
        %p197 = pneg %p55
        %p198 = pneg %p52
        %s199 = sand.u32 %s70, 1
        %s200 = scalar_lea.sflag [#allocation6], %s199
        %s201 = sand.u32 %s70, 1
        %s202 = smul.addr %s201, 8
        %s203 = scalar_lea.vmem [#allocation5], %s202
        %p204 = pneg %p83
        %p205 = pneg %p80
        %p206 = pneg %p111
        %p207 = pneg %p108
        %s208 = sand.u32 %s98, 1
        %s209 = scalar_lea.sflag [#allocation4], %s208
        %s210 = sand.u32 %s98, 1
        %s211 = smul.addr %s210, 8
        %s212 = scalar_lea.vmem [#allocation7], %s211
        %v213 = vld [vmem:[%s187] sm:$0xff]
        %v214 = vld [vmem:[%s177] sm:$0x1]
        %v216 = vperm.slane %v214, 0
        %v218 = vmul.f32 %v213, %v216
        %219 = vst [vmem:[%s212] sm:$0xff] %v218
        %s220 = sand.u32 %s98, 1
        %s221 = scalar_lea.sflag [#allocation4], %s220
        %s222 = sand.u32 %s98, 1
        %s223 = smul.addr %s222, 8
        %s224 = scalar_lea.vmem [#allocation7], %s223
        // Predicated region
        $region37: #{tpu_custom_call.1} parent=27 // pred_check
          %p225 = pneg %p108
        $region38: #{tpu_custom_call.1} parent=27 // pred_check_branch
          %227 = sbr.rel (%p225) target = $region40
        $region39: #{tpu_custom_call.1} parent=27 // pred_region
          %229 = vsyncadd %s221, 0
          %s230 = sadd.s32 %s27, %s26
          %s231 = smul.addr %s230, 8
          %s232 = scalar_lea.hbm %s2, %s231
          %s234 = sshll.u32 %s224, 4
          %s235 = int_to_ptr.vmem [resolvable:$true] %s234
          %s236 = sshll.u32 %s232, 4
          %s237 = int_to_ptr.hbm [resolvable:$true] %s236
          %239 = dma.vmem_to_hbm [thread:$0]  %s235, 128, %s237, %s221
        $region40: #{tpu_custom_call.1} parent=27 // pred_fallthru
          _
      $region28: #{tpu_custom_call.1} parent=5 // pred_fallthru
        _
      %p240 = scmp.le.s32.totalorder 2, %s17
      // Predicated region
      $region41: #{tpu_custom_call.1} parent=5 // pred_check
        %p241 = pneg %p240
      $region42: #{tpu_custom_call.1} parent=5 // pred_check_branch
        %243 = sbr.rel (%p241) target = $region44
      $region43: #{tpu_custom_call.1} parent=5 // pred_region
        %s244 = ssub.s32 %s17, 2
        // Predicated region
        $region45: #{tpu_custom_call.1} parent=43 // pred_check
          %p245 = pneg %p114
        $region46: #{tpu_custom_call.1} parent=43 // pred_check_branch
          %247 = sbr.rel (%p245) target = $region48
        $region47: #{tpu_custom_call.1} parent=43 // pred_region
          %s248 = sand.u32 %s99, 1
          %s249 = scalar_lea.sflag [#allocation4], %s248
          %s250 = sand.u32 %s99, 1
          %s251 = smul.addr %s250, 8
          %s252 = scalar_lea.vmem [#allocation7], %s251
          %254 = dma.done %s249, 128
        $region48: #{tpu_custom_call.1} parent=43 // pred_fallthru
          _
      $region44: #{tpu_custom_call.1} parent=5 // pred_fallthru
        _
    $region6: #{tpu_custom_call.1} parent=1 // loop_footer
      %s21 = sadd.s32 1, %s17
    $region7: #{tpu_custom_call.1} parent=1 // loop_footer_branch
      %16 = sbr.rel target = $region3
    $region8: #{tpu_custom_call.1} parent=1 // loop_exit
      _
    %255 = vsyncpa [#allocation3], 1
    %s256 = scalar_lea.sflag [#allocation3], 1
    %257 = vsyncpa %s256, 1
    %258 = vsyncpa [#allocation6], 1
    %s259 = scalar_lea.sflag [#allocation6], 1
    %260 = vsyncpa %s259, 1
    %261 = vsyncpa [#allocation4], 1
    %s262 = scalar_lea.sflag [#allocation4], 1
    %263 = vsyncpa %s262, 1

</llo_original>
